<compile_context>
chip_gen: v5e
topology: v5e:2x2
jax: 0.10.0
libtpu: 0.0.40
codegen_flags: <defaults>
</compile_context>

<pallas_src>
import jax
import jax.numpy as jnp
from jax import lax
from jax.experimental import pallas as pl
from jax.experimental.pallas import tpu as pltpu


def _round_up(n, m=128):
    return ((n + m - 1) // m) * m


def quantum_llm_kernel(
    x_ref,                               # (B, S, Hp) hidden_states (padded)
    we1_ref, be1_ref, we2_ref, be2_ref,  # quantum embedding (Hp->Qp->Hp)
    wv_ref, bv_ref,                      # v projection (Hp, Hp)
    wqk1_ref, bqk1_ref,                  # folded q/k proj + embed layer 1 (Hp, 2*Qp)
    wo_ref, bo_ref,                      # out_proj (Hp, Hp)
    qh_ref, out_ref,                     # outputs (B, S, Hp)
):
    B, S, Hp = x_ref.shape
    R = B * S
    Qp = we1_ref.shape[1]

    # Fold batch into the row (sublane) dimension: one big row-dense matmul
    # instead of B tiny per-batch ones.
    x = x_ref[...].reshape(R, Hp)

    we2, be2 = we2_ref[...], be2_ref[...]

    # ---- quantum_hidden = quantum_embedding(hidden_states) ----
    h0 = jnp.tanh(jnp.dot(x, we1_ref[...],
                          preferred_element_type=jnp.float32) + be1_ref[...])
    qh = jnp.dot(h0, we2, preferred_element_type=jnp.float32) + be2       # (R, Hp)
    qh_ref[...] = qh.reshape(B, S, Hp)

    # ---- QuantumAttention(quantum_hidden) ----
    # V projection (the only un-foldable projection).
    v = jnp.dot(qh, wv_ref[...], preferred_element_type=jnp.float32) + bv_ref[...]

    # q_proj+embed_layer1 and k_proj+embed_layer1 folded (in the wrapper) into a
    # single (Hp, 2*Qp) matmul; lane-aligned slices split q from k.
    h_qk = jnp.tanh(jnp.dot(qh, wqk1_ref[...],
                            preferred_element_type=jnp.float32) + bqk1_ref[...])
    # Stack q/k rows so the second embedding layer is one (2R, Qp)x(Qp, Hp) matmul.
    qk_h = jnp.concatenate([h_qk[:, :Qp], h_qk[:, Qp:]], axis=0)          # (2R, Qp)
    qk_e = jnp.dot(qk_h, we2, preferred_element_type=jnp.float32) + be2   # (2R, Hp)
    qe = qk_e[:R]
    ke = qk_e[R:]

    # quantum_enhanced_similarity(q_i, k_j) modeled as cosine similarity:
    # normalize rows, then one batched MXU matmul for the full (S, S) matrix.
    qn = qe * lax.rsqrt(jnp.sum(qe * qe, axis=-1, keepdims=True) + 1e-8)
    kn = ke * lax.rsqrt(jnp.sum(ke * ke, axis=-1, keepdims=True) + 1e-8)

    qn3 = qn.reshape(B, S, Hp)
    kn3 = kn.reshape(B, S, Hp)
    v3 = v.reshape(B, S, Hp)

    sims = jnp.einsum("bqd,bkd->bqk", qn3, kn3,
                      preferred_element_type=jnp.float32)                 # (B, S, S)

    # softmax over last dim (attention_mask=None path); denom via EUP vrcp.
    m = jnp.max(sims, axis=-1, keepdims=True)
    e = jnp.exp(sims - m)
    attn = e * pl.reciprocal(jnp.sum(e, axis=-1, keepdims=True), approx=True)

    attended = jnp.einsum("bqk,bkd->bqd", attn, v3,
                          preferred_element_type=jnp.float32)             # (B, S, Hp)

    out = (jnp.dot(attended.reshape(R, Hp), wo_ref[...],
                   preferred_element_type=jnp.float32) + bo_ref[...])
    out_ref[...] = out.reshape(B, S, Hp)


def quantum_llm_forward(hidden_states, params):
    """Returns dict with 'quantum_state' and 'hidden_states' (attended output)."""
    B, S, H = hidden_states.shape
    Qd = params["we1"].shape[1]
    Hp = _round_up(H, 128)   # lane-dense hidden dim
    Qp = _round_up(Qd, 128)  # lane-dense quantum dim

    f32 = jnp.float32

    def padw(w, rows, cols):
        w = w.astype(f32)
        return jnp.pad(w, ((0, rows - w.shape[0]), (0, cols - w.shape[1])))

    # Zero-padding weights/biases keeps the math exact; padded output lanes are 0.
    x_p = jnp.pad(hidden_states.astype(f32), ((0, 0), (0, 0), (0, Hp - H)))

    we1 = padw(params["we1"], Hp, Qp)
    be1 = padw(params["be1"], 1, Qp)
    we2 = padw(params["we2"], Qp, Hp)
    be2 = padw(params["be2"], 1, Hp)

    wv = padw(params["wv"], Hp, Hp)
    bv = padw(params["bv"], 1, Hp)
    wo = padw(params["wo"], Hp, Hp)
    bo = padw(params["bo"], 1, Hp)

    # Fold q_proj / k_proj into embedding layer 1 (exact by associativity):
    #   qembed1(x@Wq + bq) = tanh(x@(Wq@We1) + (bq@We1 + be1))
    w_q1 = params["wq"].astype(f32) @ params["we1"].astype(f32)          # (H, Qd)
    b_q1 = params["bq"].astype(f32) @ params["we1"].astype(f32) + params["be1"].astype(f32)
    w_k1 = params["wk"].astype(f32) @ params["we1"].astype(f32)
    b_k1 = params["bk"].astype(f32) @ params["we1"].astype(f32) + params["be1"].astype(f32)

    wqk1 = jnp.concatenate([padw(w_q1, Hp, Qp), padw(w_k1, Hp, Qp)], axis=1)   # (Hp, 2*Qp)
    bqk1 = jnp.concatenate([padw(b_q1, 1, Qp), padw(b_k1, 1, Qp)], axis=1)     # (1, 2*Qp)

    # Single invocation, everything resident in VMEM (no serial per-batch grid).
    qh_p, out_p = pl.pallas_call(
        quantum_llm_kernel,
        out_shape=(
            jax.ShapeDtypeStruct((B, S, Hp), f32),
            jax.ShapeDtypeStruct((B, S, Hp), f32),
        ),
        compiler_params=pltpu.CompilerParams(
            # Explicit scoped-VMEM budget (weights + activations fit with large
            # headroom at these shapes; raise before scaling H/S).
            vmem_limit_bytes=32 * 1024 * 1024,
        ),
    )(x_p, we1, be1, we2, be2, wv, bv, wqk1, bqk1, wo, bo)

    return {
        "quantum_state": qh_p[..., :H],   # quantum_embedding(hidden_states)
        "hidden_states": out_p[..., :H],  # quantum_attention output (pre-bridge)
    }


def init_params(key, hidden_dim, quantum_dim):
    ks = jax.random.split(key, 12)
    scale_h = 1.0 / jnp.sqrt(hidden_dim)
    scale_q = 1.0 / jnp.sqrt(quantum_dim)

    def lin(k, din, dout, scale):
        return jax.random.normal(k, (din, dout), jnp.float32) * scale

    return {
        "wq": lin(ks[0], hidden_dim, hidden_dim, scale_h),
        "bq": jnp.zeros((1, hidden_dim), jnp.float32),
        "wk": lin(ks[1], hidden_dim, hidden_dim, scale_h),
        "bk": jnp.zeros((1, hidden_dim), jnp.float32),
        "wv": lin(ks[2], hidden_dim, hidden_dim, scale_h),
        "bv": jnp.zeros((1, hidden_dim), jnp.float32),
        "we1": lin(ks[3], hidden_dim, quantum_dim, scale_h),
        "be1": jnp.zeros((1, quantum_dim), jnp.float32),
        "we2": lin(ks[4], quantum_dim, hidden_dim, scale_q),
        "be2": jnp.zeros((1, hidden_dim), jnp.float32),
        "wo": lin(ks[5], hidden_dim, hidden_dim, scale_h),
        "bo": jnp.zeros((1, hidden_dim), jnp.float32),
    }


def reference_forward(hidden_states, params):
    """Plain-JAX reference of the same math (for a sanity check)."""
    def qembed(t):
        h = jnp.tanh(t @ params["we1"] + params["be1"])
        return h @ params["we2"] + params["be2"]

    qh = qembed(hidden_states)
    q = qh @ params["wq"] + params["bq"]
    k = qh @ params["wk"] + params["bk"]
    v = qh @ params["wv"] + params["bv"]
    qe, ke = qembed(q), qembed(k)
    qn = qe / jnp.sqrt(jnp.sum(qe * qe, -1, keepdims=True) + 1e-8)
    kn = ke / jnp.sqrt(jnp.sum(ke * ke, -1, keepdims=True) + 1e-8)
    sims = jnp.einsum("bqd,bkd->bqk", qn, kn)
    attn = jax.nn.softmax(sims, axis=-1)
    attended = jnp.einsum("bqk,bkd->bqd", attn, v)
    out = attended @ params["wo"] + params["bo"]
    return qh, out


if __name__ == "__main__":
    # Small shapes consistent with the module: batch=2, seq=8,
    # consciousness_hidden_dim=32, quantum_dim=16.
    B, S, H, Qd = 2, 8, 32, 16

    key = jax.random.PRNGKey(0)
    k_x, k_p = jax.random.split(key)
    hidden_states = jax.random.normal(k_x, (B, S, H), jnp.float32)
    params = init_params(k_p, H, Qd)

    outputs = jax.jit(quantum_llm_forward)(hidden_states, params)
    jax.block_until_ready(outputs)

    ref_qh, ref_out = reference_forward(hidden_states, params)
    # Tolerance covers the EUP approximate reciprocal in the softmax denominator
    # and the (exact-in-real-arithmetic) q/k projection folding; everything else
    # is plain f32 matmul math.
    assert jnp.allclose(outputs["quantum_state"], ref_qh, atol=1e-2, rtol=1e-2)
    assert jnp.allclose(outputs["hidden_states"], ref_out, atol=1e-2, rtol=1e-2)

    print("KERNEL_OK")
</pallas_src>

<mosaic_0001>
module attributes {stable_mosaic.version = 11 : i64} {
  func.func @quantum_llm_kernel(%arg0: memref<2x8x128xf32, #tpu.memory_space<vmem>>, %arg1: memref<128x128xf32, #tpu.memory_space<vmem>>, %arg2: memref<1x128xf32, #tpu.memory_space<vmem>>, %arg3: memref<128x128xf32, #tpu.memory_space<vmem>>, %arg4: memref<1x128xf32, #tpu.memory_space<vmem>>, %arg5: memref<128x128xf32, #tpu.memory_space<vmem>>, %arg6: memref<1x128xf32, #tpu.memory_space<vmem>>, %arg7: memref<128x256xf32, #tpu.memory_space<vmem>>, %arg8: memref<1x256xf32, #tpu.memory_space<vmem>>, %arg9: memref<128x128xf32, #tpu.memory_space<vmem>>, %arg10: memref<1x128xf32, #tpu.memory_space<vmem>>, %arg11: memref<2x8x128xf32, #tpu.memory_space<vmem>>, %arg12: memref<2x8x128xf32, #tpu.memory_space<vmem>>) attributes {dimension_semantics = [], scalar_prefetch = 0 : i64, scratch_operands = 0 : i64, tpu.core_type = #tpu.core_type<tc>} {
    %c0 = arith.constant 0 : index
    %c0_0 = arith.constant 0 : index
    %c0_1 = arith.constant 0 : index
    %0 = vector.load %arg0[%c0, %c0_0, %c0_1] : memref<2x8x128xf32, #tpu.memory_space<vmem>>, vector<2x8x128xf32>
    %1 = vector.shape_cast %0 : vector<2x8x128xf32> to vector<16x128xf32>
    %c0_2 = arith.constant 0 : index
    %c0_3 = arith.constant 0 : index
    %2 = vector.load %arg3[%c0_2, %c0_3] : memref<128x128xf32, #tpu.memory_space<vmem>>, vector<128x128xf32>
    %c0_4 = arith.constant 0 : index
    %c0_5 = arith.constant 0 : index
    %3 = vector.load %arg4[%c0_4, %c0_5] : memref<1x128xf32, #tpu.memory_space<vmem>>, vector<1x128xf32>
    %c0_6 = arith.constant 0 : index
    %c0_7 = arith.constant 0 : index
    %4 = vector.load %arg1[%c0_6, %c0_7] : memref<128x128xf32, #tpu.memory_space<vmem>>, vector<128x128xf32>
    %cst = arith.constant dense<0.000000e+00> : vector<16x128xf32>
    %5 = tpu.matmul %1, %4, %cst {dimension_numbers = #tpu.dot_dimension_numbers<[1], [0], [0], [1], [0, 0, 1, 1], [], []>} : vector<16x128xf32>, vector<128x128xf32>, vector<16x128xf32> -> vector<16x128xf32>
    %c0_8 = arith.constant 0 : index
    %c0_9 = arith.constant 0 : index
    %6 = vector.load %arg2[%c0_8, %c0_9] : memref<1x128xf32, #tpu.memory_space<vmem>>, vector<1x128xf32>
    %7 = vector.broadcast %6 : vector<1x128xf32> to vector<16x128xf32>
    %8 = arith.addf %5, %7 : vector<16x128xf32>
    %9 = math.tanh %8 : vector<16x128xf32>
    %cst_10 = arith.constant dense<0.000000e+00> : vector<16x128xf32>
    %10 = tpu.matmul %9, %2, %cst_10 {dimension_numbers = #tpu.dot_dimension_numbers<[1], [0], [0], [1], [0, 0, 1, 1], [], []>} : vector<16x128xf32>, vector<128x128xf32>, vector<16x128xf32> -> vector<16x128xf32>
    %11 = vector.broadcast %3 : vector<1x128xf32> to vector<16x128xf32>
    %12 = arith.addf %10, %11 : vector<16x128xf32>
    %13 = vector.shape_cast %12 : vector<16x128xf32> to vector<2x8x128xf32>
    %c0_11 = arith.constant 0 : index
    %c0_12 = arith.constant 0 : index
    %c0_13 = arith.constant 0 : index
    %14 = vector.load %arg11[%c0_11, %c0_12, %c0_13] : memref<2x8x128xf32, #tpu.memory_space<vmem>>, vector<2x8x128xf32>
    tpu.vector_store %arg11[%c0_11, %c0_12, %c0_13], %13 {strides = array<i32>} : memref<2x8x128xf32, #tpu.memory_space<vmem>>, vector<2x8x128xf32>,
    %c0_14 = arith.constant 0 : index
    %c0_15 = arith.constant 0 : index
    %15 = vector.load %arg5[%c0_14, %c0_15] : memref<128x128xf32, #tpu.memory_space<vmem>>, vector<128x128xf32>
    %cst_16 = arith.constant dense<0.000000e+00> : vector<16x128xf32>
    %16 = tpu.matmul %12, %15, %cst_16 {dimension_numbers = #tpu.dot_dimension_numbers<[1], [0], [0], [1], [0, 0, 1, 1], [], []>} : vector<16x128xf32>, vector<128x128xf32>, vector<16x128xf32> -> vector<16x128xf32>
    %c0_17 = arith.constant 0 : index
    %c0_18 = arith.constant 0 : index
    %17 = vector.load %arg6[%c0_17, %c0_18] : memref<1x128xf32, #tpu.memory_space<vmem>>, vector<1x128xf32>
    %18 = vector.broadcast %17 : vector<1x128xf32> to vector<16x128xf32>
    %19 = arith.addf %16, %18 : vector<16x128xf32>
    %c0_19 = arith.constant 0 : index
    %c0_20 = arith.constant 0 : index
    %20 = vector.load %arg7[%c0_19, %c0_20] : memref<128x256xf32, #tpu.memory_space<vmem>>, vector<128x256xf32>
    %cst_21 = arith.constant dense<0.000000e+00> : vector<16x256xf32>
    %21 = tpu.matmul %12, %20, %cst_21 {dimension_numbers = #tpu.dot_dimension_numbers<[1], [0], [0], [1], [0, 0, 1, 1], [], []>} : vector<16x128xf32>, vector<128x256xf32>, vector<16x256xf32> -> vector<16x256xf32>
    %c0_22 = arith.constant 0 : index
    %c0_23 = arith.constant 0 : index
    %22 = vector.load %arg8[%c0_22, %c0_23] : memref<1x256xf32, #tpu.memory_space<vmem>>, vector<1x256xf32>
    %23 = vector.broadcast %22 : vector<1x256xf32> to vector<16x256xf32>
    %24 = arith.addf %21, %23 : vector<16x256xf32>
    %25 = math.tanh %24 : vector<16x256xf32>
    %26 = vector.extract_strided_slice %25 {offsets = [0, 0], sizes = [16, 128], strides = [1, 1]} : vector<16x256xf32> to vector<16x128xf32>
    %27 = vector.extract_strided_slice %25 {offsets = [0, 128], sizes = [16, 128], strides = [1, 1]} : vector<16x256xf32> to vector<16x128xf32>
    %28 = tpu.concatenate %26, %27 in 0 : vector<16x128xf32>, vector<16x128xf32> -> vector<32x128xf32>
    %cst_24 = arith.constant dense<0.000000e+00> : vector<32x128xf32>
    %29 = tpu.matmul %28, %2, %cst_24 {dimension_numbers = #tpu.dot_dimension_numbers<[1], [0], [0], [1], [0, 0, 1, 1], [], []>} : vector<32x128xf32>, vector<128x128xf32>, vector<32x128xf32> -> vector<32x128xf32>
    %30 = vector.broadcast %3 : vector<1x128xf32> to vector<32x128xf32>
    %31 = arith.addf %29, %30 : vector<32x128xf32>
    %32 = vector.extract_strided_slice %31 {offsets = [0, 0], sizes = [16, 128], strides = [1, 1]} : vector<32x128xf32> to vector<16x128xf32>
    %33 = vector.extract_strided_slice %31 {offsets = [16, 0], sizes = [16, 128], strides = [1, 1]} : vector<32x128xf32> to vector<16x128xf32>
    %34 = arith.mulf %32, %32 : vector<16x128xf32>
    %cst_25 = arith.constant dense<0.000000e+00> : vector<16xf32>
    %35 = vector.multi_reduction <add>, %34, %cst_25 [1] : vector<16x128xf32> to vector<16xf32>
    %36 = vector.shape_cast %35 : vector<16xf32> to vector<16x1xf32>
    %cst_26 = arith.constant 9.99999993E-9 : f32
    %37 = vector.broadcast %cst_26 : f32 to vector<16x1xf32>
    %38 = arith.addf %36, %37 : vector<16x1xf32>
    %39 = math.rsqrt %38 : vector<16x1xf32>
    %40 = vector.broadcast %39 : vector<16x1xf32> to vector<16x128xf32>
    %41 = arith.mulf %32, %40 : vector<16x128xf32>
    %42 = arith.mulf %33, %33 : vector<16x128xf32>
    %cst_27 = arith.constant dense<0.000000e+00> : vector<16xf32>
    %43 = vector.multi_reduction <add>, %42, %cst_27 [1] : vector<16x128xf32> to vector<16xf32>
    %44 = vector.shape_cast %43 : vector<16xf32> to vector<16x1xf32>
    %cst_28 = arith.constant 9.99999993E-9 : f32
    %45 = vector.broadcast %cst_28 : f32 to vector<16x1xf32>
    %46 = arith.addf %44, %45 : vector<16x1xf32>
    %47 = math.rsqrt %46 : vector<16x1xf32>
    %48 = vector.broadcast %47 : vector<16x1xf32> to vector<16x128xf32>
    %49 = arith.mulf %33, %48 : vector<16x128xf32>
    %50 = vector.shape_cast %41 : vector<16x128xf32> to vector<2x8x128xf32>
    %51 = vector.shape_cast %49 : vector<16x128xf32> to vector<2x8x128xf32>
    %52 = vector.shape_cast %19 : vector<16x128xf32> to vector<2x8x128xf32>
    "tpu.trace_start"() <{level = 10 : i32, message = "bqd,bkd->bqk"}> : () -> ()
    %cst_29 = arith.constant dense<0.000000e+00> : vector<2x8x8xf32>
    %53 = tpu.matmul %50, %51, %cst_29 {dimension_numbers = #tpu.dot_dimension_numbers<[2], [2], [1], [1], [0, 0, 0, 1, 1, 1], [0], [0]>} : vector<2x8x128xf32>, vector<2x8x128xf32>, vector<2x8x8xf32> -> vector<2x8x8xf32>
    "tpu.trace_stop"() : () -> ()
    %cst_30 = arith.constant dense<0xFF800000> : vector<2x8xf32>
    %54 = vector.multi_reduction <maximumf>, %53, %cst_30 [2] : vector<2x8x8xf32> to vector<2x8xf32>
    %55 = vector.shape_cast %54 : vector<2x8xf32> to vector<2x8x1xf32>
    %56 = vector.broadcast %55 : vector<2x8x1xf32> to vector<2x8x8xf32>
    %57 = arith.subf %53, %56 : vector<2x8x8xf32>
    %58 = math.exp %57 : vector<2x8x8xf32>
    %cst_31 = arith.constant dense<0.000000e+00> : vector<2x8xf32>
    %59 = vector.multi_reduction <add>, %58, %cst_31 [2] : vector<2x8x8xf32> to vector<2x8xf32>
    %60 = vector.shape_cast %59 : vector<2x8xf32> to vector<2x8x1xf32>
    %61 = tpu.reciprocal %60 {approx = true} : vector<2x8x1xf32> -> vector<2x8x1xf32>
    %62 = vector.broadcast %61 : vector<2x8x1xf32> to vector<2x8x8xf32>
    %63 = arith.mulf %58, %62 : vector<2x8x8xf32>
    "tpu.trace_start"() <{level = 10 : i32, message = "bqk,bkd->bqd"}> : () -> ()
    %cst_32 = arith.constant dense<0.000000e+00> : vector<2x8x128xf32>
    %64 = tpu.matmul %63, %52, %cst_32 {dimension_numbers = #tpu.dot_dimension_numbers<[2], [1], [1], [2], [0, 0, 0, 1, 1, 2], [0], [0]>} : vector<2x8x8xf32>, vector<2x8x128xf32>, vector<2x8x128xf32> -> vector<2x8x128xf32>
    "tpu.trace_stop"() : () -> ()
    %65 = vector.shape_cast %64 : vector<2x8x128xf32> to vector<16x128xf32>
    %c0_33 = arith.constant 0 : index
    %c0_34 = arith.constant 0 : index
    %66 = vector.load %arg9[%c0_33, %c0_34] : memref<128x128xf32, #tpu.memory_space<vmem>>, vector<128x128xf32>
    %cst_35 = arith.constant dense<0.000000e+00> : vector<16x128xf32>
    %67 = tpu.matmul %65, %66, %cst_35 {dimension_numbers = #tpu.dot_dimension_numbers<[1], [0], [0], [1], [0, 0, 1, 1], [], []>} : vector<16x128xf32>, vector<128x128xf32>, vector<16x128xf32> -> vector<16x128xf32>
    %c0_36 = arith.constant 0 : index
    %c0_37 = arith.constant 0 : index
    %68 = vector.load %arg10[%c0_36, %c0_37] : memref<1x128xf32, #tpu.memory_space<vmem>>, vector<1x128xf32>
    %69 = vector.broadcast %68 : vector<1x128xf32> to vector<16x128xf32>
    %70 = arith.addf %67, %69 : vector<16x128xf32>
    %71 = vector.shape_cast %70 : vector<16x128xf32> to vector<2x8x128xf32>
    %c0_38 = arith.constant 0 : index
    %c0_39 = arith.constant 0 : index
    %c0_40 = arith.constant 0 : index
    %72 = vector.load %arg12[%c0_38, %c0_39, %c0_40] : memref<2x8x128xf32, #tpu.memory_space<vmem>>, vector<2x8x128xf32>
    tpu.vector_store %arg12[%c0_38, %c0_39, %c0_40], %71 {strides = array<i32>} : memref<2x8x128xf32, #tpu.memory_space<vmem>>, vector<2x8x128xf32>,
    return
  }
}

</mosaic_0001>

<llo_original>
// kernel: quantum_llm_forward.1
$region0: #{quantum_llm_forward.1}
  #allocation0 [shape = 'u32[]', space=smem, size = 0x4, offset = 0x4, fixed_abs, tag = 'smem constant byte address 0x4 - core index']
  #allocation1 [shape = 'u32[72,128]{1,0:T(1,128)}', space=vmem, size = 0x9000, scoped, tag = 'internal scratch']
  %s0 = inlined_call_operand.vmem [shape: f32[2,8,128], index: 0, kind: input, shape index: {}]
  %s1 = inlined_call_operand.vmem [shape: f32[128,128], index: 1, kind: input, shape index: {}]
  %s2 = inlined_call_operand.vmem [shape: f32[1,128], index: 2, kind: input, shape index: {}]
  %s3 = inlined_call_operand.vmem [shape: f32[128,128], index: 3, kind: input, shape index: {}]
  %s4 = inlined_call_operand.vmem [shape: f32[1,128], index: 4, kind: input, shape index: {}]
  %s5 = inlined_call_operand.vmem [shape: f32[128,128], index: 5, kind: input, shape index: {}]
  %s6 = inlined_call_operand.vmem [shape: f32[1,128], index: 6, kind: input, shape index: {}]
  %s7 = inlined_call_operand.vmem [shape: f32[128,256], index: 7, kind: input, shape index: {}]
  %s8 = inlined_call_operand.vmem [shape: f32[1,256], index: 8, kind: input, shape index: {}]
  %s9 = inlined_call_operand.vmem [shape: f32[128,128], index: 9, kind: input, shape index: {}]
  %s10 = inlined_call_operand.vmem [shape: f32[1,128], index: 10, kind: input, shape index: {}]
  %s11 = inlined_call_operand.hbm [shape: f32[2,8,128], index: 11, kind: output, shape index: {0}]
  %s12 = inlined_call_operand.hbm [shape: f32[2,8,128], index: 12, kind: output, shape index: {1}]
  %13 = xla_tuple %s11, %s12
  %s14 = sld [smem:[#allocation0]]
  $region62: #{quantum_llm_forward.1} parent=0
    _
  %s16 = ssub.s32 1, %s14
  %s17 = scalar_select 0, %s16, %s14
  $region1: #{quantum_llm_forward.1} parent=0
    #allocation2 [shape = 'u8[8192]{0}', space=vmem, size = 0x2000, scoped, tag = 'output window, operand 0, single buffered']
    #allocation3 [shape = 's32[1]{0}', space=sflag, size = 0x4, scoped, tag = 'scoped memory for quantum_llm_forward.1']
    #allocation4 [shape = 'u8[8192]{0}', space=vmem, size = 0x2000, scoped, tag = 'output window, operand 1, single buffered']
    #allocation5 [shape = 's32[1]{0}', space=sflag, size = 0x4, scoped, tag = 'scoped memory for quantum_llm_forward.1']
    %18 = vsyncpa [#allocation3], 0
    %19 = vsyncpa [#allocation5], 0
    // Predicated region
    $region2: #{quantum_llm_forward.1} parent=1 // pred_check
      _
    $region3: #{quantum_llm_forward.1} parent=1 // pred_check_branch
      %21 = sbr.rel (0) target = $region5
    $region4: #{quantum_llm_forward.1} parent=1 // pred_region
      _
    $region5: #{quantum_llm_forward.1} parent=1 // pred_fallthru
      _
    // Predicated region
    $region6: #{quantum_llm_forward.1} parent=1 // pred_check
      _
    $region7: #{quantum_llm_forward.1} parent=1 // pred_check_branch
      %23 = sbr.rel (0) target = $region9
    $region8: #{quantum_llm_forward.1} parent=1 // pred_region
      _
    $region9: #{quantum_llm_forward.1} parent=1 // pred_fallthru
      _
    // Predicated region
    $region10: #{quantum_llm_forward.1} parent=1 // pred_check
      _
    $region11: #{quantum_llm_forward.1} parent=1 // pred_check_branch
      %25 = sbr.rel (0) target = $region13
    $region12: #{quantum_llm_forward.1} parent=1 // pred_region
      _
    $region13: #{quantum_llm_forward.1} parent=1 // pred_fallthru
      _
    // Predicated region
    $region14: #{quantum_llm_forward.1} parent=1 // pred_check
      _
    $region15: #{quantum_llm_forward.1} parent=1 // pred_check_branch
      %27 = sbr.rel (0) target = $region17
    $region16: #{quantum_llm_forward.1} parent=1 // pred_region
      _
    $region17: #{quantum_llm_forward.1} parent=1 // pred_fallthru
      _
    // Predicated region
    $region18: #{quantum_llm_forward.1} parent=1 // pred_check
      _
    $region19: #{quantum_llm_forward.1} parent=1 // pred_check_branch
      %29 = sbr.rel (0) target = $region21
    $region20: #{quantum_llm_forward.1} parent=1 // pred_region
      _
    $region21: #{quantum_llm_forward.1} parent=1 // pred_fallthru
      _
    // Predicated region
    $region22: #{quantum_llm_forward.1} parent=1 // pred_check
      _
    $region23: #{quantum_llm_forward.1} parent=1 // pred_check_branch
      %31 = sbr.rel (0) target = $region25
    $region24: #{quantum_llm_forward.1} parent=1 // pred_region
      _
    $region25: #{quantum_llm_forward.1} parent=1 // pred_fallthru
      _
    // Predicated region
    $region26: #{quantum_llm_forward.1} parent=1 // pred_check
      _
    $region27: #{quantum_llm_forward.1} parent=1 // pred_check_branch
      %33 = sbr.rel (0) target = $region29
    $region28: #{quantum_llm_forward.1} parent=1 // pred_region
      _
    $region29: #{quantum_llm_forward.1} parent=1 // pred_fallthru
      _
    // Predicated region
    $region30: #{quantum_llm_forward.1} parent=1 // pred_check
      _
    $region31: #{quantum_llm_forward.1} parent=1 // pred_check_branch
      %35 = sbr.rel (0) target = $region33
    $region32: #{quantum_llm_forward.1} parent=1 // pred_region
      _
    $region33: #{quantum_llm_forward.1} parent=1 // pred_fallthru
      _
    // Predicated region
    $region34: #{quantum_llm_forward.1} parent=1 // pred_check
      _
    $region35: #{quantum_llm_forward.1} parent=1 // pred_check_branch
      %37 = sbr.rel (0) target = $region37
    $region36: #{quantum_llm_forward.1} parent=1 // pred_region
      _
    $region37: #{quantum_llm_forward.1} parent=1 // pred_fallthru
      _
    // Predicated region
    $region38: #{quantum_llm_forward.1} parent=1 // pred_check
      _
    $region39: #{quantum_llm_forward.1} parent=1 // pred_check_branch
      %39 = sbr.rel (0) target = $region41
    $region40: #{quantum_llm_forward.1} parent=1 // pred_region
      _
    $region41: #{quantum_llm_forward.1} parent=1 // pred_fallthru
      _
    // Predicated region
    $region42: #{quantum_llm_forward.1} parent=1 // pred_check
      _
    $region43: #{quantum_llm_forward.1} parent=1 // pred_check_branch
      %41 = sbr.rel (0) target = $region45
    $region44: #{quantum_llm_forward.1} parent=1 // pred_region
      _
    $region45: #{quantum_llm_forward.1} parent=1 // pred_fallthru
      _
    %v42 = vld [vmem:[%s0] sm:$0xff]
    %v43 = vld [vmem:[%s0 + $0x8] sm:$0xff]
    %v44 = vld [vmem:[%s3] sm:$0xff]
    %v45 = vld [vmem:[%s3 + $0x8] sm:$0xff]
    %v46 = vld [vmem:[%s3 + $0x10] sm:$0xff]
    %v47 = vld [vmem:[%s3 + $0x18] sm:$0xff]
    %v48 = vld [vmem:[%s3 + $0x20] sm:$0xff]
    %v49 = vld [vmem:[%s3 + $0x28] sm:$0xff]
    %v50 = vld [vmem:[%s3 + $0x30] sm:$0xff]
    %v51 = vld [vmem:[%s3 + $0x38] sm:$0xff]
    %v52 = vld [vmem:[%s3 + $0x40] sm:$0xff]
    %v53 = vld [vmem:[%s3 + $0x48] sm:$0xff]
    %v54 = vld [vmem:[%s3 + $0x50] sm:$0xff]
    %v55 = vld [vmem:[%s3 + $0x58] sm:$0xff]
    %v56 = vld [vmem:[%s3 + $0x60] sm:$0xff]
    %v57 = vld [vmem:[%s3 + $0x68] sm:$0xff]
    %v58 = vld [vmem:[%s3 + $0x70] sm:$0xff]
    %v59 = vld [vmem:[%s3 + $0x78] sm:$0xff]
    %v60 = vld [vmem:[%s4] sm:$0x1]
    %v61 = vld [vmem:[%s1] sm:$0xff]
    %v62 = vld [vmem:[%s1 + $0x8] sm:$0xff]
    %v63 = vld [vmem:[%s1 + $0x10] sm:$0xff]
    %v64 = vld [vmem:[%s1 + $0x18] sm:$0xff]
    %v65 = vld [vmem:[%s1 + $0x20] sm:$0xff]
    %v66 = vld [vmem:[%s1 + $0x28] sm:$0xff]
    %v67 = vld [vmem:[%s1 + $0x30] sm:$0xff]
    %v68 = vld [vmem:[%s1 + $0x38] sm:$0xff]
    %v69 = vld [vmem:[%s1 + $0x40] sm:$0xff]
    %v70 = vld [vmem:[%s1 + $0x48] sm:$0xff]
    %v71 = vld [vmem:[%s1 + $0x50] sm:$0xff]
    %v72 = vld [vmem:[%s1 + $0x58] sm:$0xff]
    %v73 = vld [vmem:[%s1 + $0x60] sm:$0xff]
    %v74 = vld [vmem:[%s1 + $0x68] sm:$0xff]
    %v75 = vld [vmem:[%s1 + $0x70] sm:$0xff]
    %v76 = vld [vmem:[%s1 + $0x78] sm:$0xff]
    %v77 = vld [vmem:[%s2] sm:$0x1]
    %v79 = vperm.slane %v77, 0
    %81 = vmatpush.msra.mxu0 %v76
    %82 = vmatpush.msra.mxu0 %v75
    %83 = vmatpush.msra.mxu0 %v74
    %84 = vmatpush.msra.mxu0 %v73
    %85 = vmatpush.msra.mxu0 %v72
    %86 = vmatpush.msra.mxu0 %v71
    %87 = vmatpush.msra.mxu0 %v70
    %88 = vmatpush.msra.mxu0 %v69
    %89 = vmatpush.msra.mxu0 %v68
    %90 = vmatpush.msra.mxu0 %v67
    %91 = vmatpush.msra.mxu0 %v66
    %92 = vmatpush.msra.mxu0 %v65
    %93 = vmatpush.msra.mxu0 %v64
    %94 = vmatpush.msra.mxu0 %v63
    %95 = vmatpush.msra.mxu0 %v62
    %96 = vmatpush.msra.mxu0 %v61
    %97 = vmatmul.f32.gmra.mxu0 %v42
    %v98 = vpop.f32.mrf.mxu0
    %v99 = vadd.f32 %v79, %v98
    %100 = vmatmul.f32.gmra.mxu0 %v43
    %v101 = vpop.f32.mrf.mxu0
    %v102 = vadd.f32 %v79, %v101
    %103 = vdwg.mxu0
    %v104 = vtanh.pop %v99
    %v105 = vtanh.pop %v102
    %v107 = vperm.slane %v60, 0
    %109 = vmatpush.msra.mxu0 %v59
    %110 = vmatpush.msra.mxu0 %v58
    %111 = vmatpush.msra.mxu0 %v57
    %112 = vmatpush.msra.mxu0 %v56
    %113 = vmatpush.msra.mxu0 %v55
    %114 = vmatpush.msra.mxu0 %v54
    %115 = vmatpush.msra.mxu0 %v53
    %116 = vmatpush.msra.mxu0 %v52
    %117 = vmatpush.msra.mxu0 %v51
    %118 = vmatpush.msra.mxu0 %v50
    %119 = vmatpush.msra.mxu0 %v49
    %120 = vmatpush.msra.mxu0 %v48
    %121 = vmatpush.msra.mxu0 %v47
    %122 = vmatpush.msra.mxu0 %v46
    %123 = vmatpush.msra.mxu0 %v45
    %124 = vmatpush.msra.mxu0 %v44
    %125 = vmatmul.f32.gmra.mxu0 %v104
    %v126 = vpop.f32.mrf.mxu0
    %v127 = vadd.f32 %v107, %v126
    %128 = vmatmul.f32.gmra.mxu0 %v105
    %v129 = vpop.f32.mrf.mxu0
    %v130 = vadd.f32 %v107, %v129
    %131 = vdwg.mxu0
    %132 = vst [vmem:[#allocation2] sm:$0xff] %v127
    %133 = vst [vmem:[#allocation2 + $0x8] sm:$0xff] %v130
    %v134 = vld [vmem:[%s5] sm:$0xff]
    %v135 = vld [vmem:[%s5 + $0x8] sm:$0xff]
    %v136 = vld [vmem:[%s5 + $0x10] sm:$0xff]
    %v137 = vld [vmem:[%s5 + $0x18] sm:$0xff]
    %v138 = vld [vmem:[%s5 + $0x20] sm:$0xff]
    %v139 = vld [vmem:[%s5 + $0x28] sm:$0xff]
    %v140 = vld [vmem:[%s5 + $0x30] sm:$0xff]
    %v141 = vld [vmem:[%s5 + $0x38] sm:$0xff]
    %v142 = vld [vmem:[%s5 + $0x40] sm:$0xff]
    %v143 = vld [vmem:[%s5 + $0x48] sm:$0xff]
    %v144 = vld [vmem:[%s5 + $0x50] sm:$0xff]
    %v145 = vld [vmem:[%s5 + $0x58] sm:$0xff]
    %v146 = vld [vmem:[%s5 + $0x60] sm:$0xff]
    %v147 = vld [vmem:[%s5 + $0x68] sm:$0xff]
    %v148 = vld [vmem:[%s5 + $0x70] sm:$0xff]
    %v149 = vld [vmem:[%s5 + $0x78] sm:$0xff]
    %v150 = vld [vmem:[%s6] sm:$0x1]
    %v152 = vperm.slane %v150, 0
    %154 = vmatpush.msra.mxu0 %v149
    %155 = vmatpush.msra.mxu0 %v148
    %156 = vmatpush.msra.mxu0 %v147
    %157 = vmatpush.msra.mxu0 %v146
    %158 = vmatpush.msra.mxu0 %v145
    %159 = vmatpush.msra.mxu0 %v144
    %160 = vmatpush.msra.mxu0 %v143
    %161 = vmatpush.msra.mxu0 %v142
    %162 = vmatpush.msra.mxu0 %v141
    %163 = vmatpush.msra.mxu0 %v140
    %164 = vmatpush.msra.mxu0 %v139
    %165 = vmatpush.msra.mxu0 %v138
    %166 = vmatpush.msra.mxu0 %v137
    %167 = vmatpush.msra.mxu0 %v136
    %168 = vmatpush.msra.mxu0 %v135
    %169 = vmatpush.msra.mxu0 %v134
    %170 = vmatmul.f32.gmra.mxu0 %v127
    %v171 = vpop.f32.mrf.mxu0
    %v172 = vadd.f32 %v152, %v171
    %173 = vmatmul.f32.gmra.mxu0 %v130
    %v174 = vpop.f32.mrf.mxu0
    %v175 = vadd.f32 %v152, %v174
    %176 = vdwg.mxu0
    %v177 = vld [vmem:[%s7] sm:$0xff]
    %v178 = vld [vmem:[%s7 + $0x8] sm:$0xff]
    %v179 = vld [vmem:[%s7 + $0x10] sm:$0xff]
    %v180 = vld [vmem:[%s7 + $0x18] sm:$0xff]
    %v181 = vld [vmem:[%s7 + $0x20] sm:$0xff]
    %v182 = vld [vmem:[%s7 + $0x28] sm:$0xff]
    %v183 = vld [vmem:[%s7 + $0x30] sm:$0xff]
    %v184 = vld [vmem:[%s7 + $0x38] sm:$0xff]
    %v185 = vld [vmem:[%s7 + $0x40] sm:$0xff]
    %v186 = vld [vmem:[%s7 + $0x48] sm:$0xff]
    %v187 = vld [vmem:[%s7 + $0x50] sm:$0xff]
    %v188 = vld [vmem:[%s7 + $0x58] sm:$0xff]
    %v189 = vld [vmem:[%s7 + $0x60] sm:$0xff]
    %v190 = vld [vmem:[%s7 + $0x68] sm:$0xff]
    %v191 = vld [vmem:[%s7 + $0x70] sm:$0xff]
    %v192 = vld [vmem:[%s7 + $0x78] sm:$0xff]
    %v193 = vld [vmem:[%s7 + $0x80] sm:$0xff]
    %v194 = vld [vmem:[%s7 + $0x88] sm:$0xff]
    %v195 = vld [vmem:[%s7 + $0x90] sm:$0xff]
    %v196 = vld [vmem:[%s7 + $0x98] sm:$0xff]
    %v197 = vld [vmem:[%s7 + $0xa0] sm:$0xff]
    %v198 = vld [vmem:[%s7 + $0xa8] sm:$0xff]
    %v199 = vld [vmem:[%s7 + $0xb0] sm:$0xff]
    %v200 = vld [vmem:[%s7 + $0xb8] sm:$0xff]
    %v201 = vld [vmem:[%s7 + $0xc0] sm:$0xff]
    %v202 = vld [vmem:[%s7 + $0xc8] sm:$0xff]
    %v203 = vld [vmem:[%s7 + $0xd0] sm:$0xff]
    %v204 = vld [vmem:[%s7 + $0xd8] sm:$0xff]
    %v205 = vld [vmem:[%s7 + $0xe0] sm:$0xff]
    %v206 = vld [vmem:[%s7 + $0xe8] sm:$0xff]
    %v207 = vld [vmem:[%s7 + $0xf0] sm:$0xff]
    %v208 = vld [vmem:[%s7 + $0xf8] sm:$0xff]
    %v209 = vld [vmem:[%s8] sm:$0x3]
    %v211 = vperm.slane %v209, 0
    %v212 = vperm.slane %v209, 1
    %215 = vmatpush.msra.mxu0 %v207
    %216 = vmatpush.msra.mxu0 %v205
    %217 = vmatpush.msra.mxu0 %v203
    %218 = vmatpush.msra.mxu0 %v201
    %219 = vmatpush.msra.mxu0 %v199
    %220 = vmatpush.msra.mxu0 %v197
    %221 = vmatpush.msra.mxu0 %v195
    %222 = vmatpush.msra.mxu0 %v193
    %223 = vmatpush.msra.mxu0 %v191
    %224 = vmatpush.msra.mxu0 %v189
    %225 = vmatpush.msra.mxu0 %v187
    %226 = vmatpush.msra.mxu0 %v185
    %227 = vmatpush.msra.mxu0 %v183
    %228 = vmatpush.msra.mxu0 %v181
    %229 = vmatpush.msra.mxu0 %v179
    %230 = vmatpush.msra.mxu0 %v177
    %231 = vmatmul.f32.gmra.mxu0 %v127
    %v232 = vpop.f32.mrf.mxu0
    %v233 = vadd.f32 %v211, %v232
    %234 = vmatmul.f32.gmra.mxu0 %v130
    %v235 = vpop.f32.mrf.mxu0
    %v236 = vadd.f32 %v211, %v235
    %237 = vdwg.mxu0
    %238 = vmatpush.msra.mxu0 %v208
    %239 = vmatpush.msra.mxu0 %v206
    %240 = vmatpush.msra.mxu0 %v204
    %241 = vmatpush.msra.mxu0 %v202
    %242 = vmatpush.msra.mxu0 %v200
    %243 = vmatpush.msra.mxu0 %v198
    %244 = vmatpush.msra.mxu0 %v196
    %245 = vmatpush.msra.mxu0 %v194
    %246 = vmatpush.msra.mxu0 %v192
    %247 = vmatpush.msra.mxu0 %v190
    %248 = vmatpush.msra.mxu0 %v188
    %249 = vmatpush.msra.mxu0 %v186
    %250 = vmatpush.msra.mxu0 %v184
    %251 = vmatpush.msra.mxu0 %v182
    %252 = vmatpush.msra.mxu0 %v180
    %253 = vmatpush.msra.mxu0 %v178
    %254 = vmatmul.f32.gmra.mxu0 %v127
    %v255 = vpop.f32.mrf.mxu0
    %v256 = vadd.f32 %v212, %v255
    %257 = vmatmul.f32.gmra.mxu0 %v130
    %v258 = vpop.f32.mrf.mxu0
    %v259 = vadd.f32 %v212, %v258
    %260 = vdwg.mxu0
    %v261 = vtanh.pop %v233
    %v262 = vtanh.pop %v256
    %v263 = vtanh.pop %v236
    %v264 = vtanh.pop %v259
    %265 = vmatpush.msra.mxu0 %v59
    %266 = vmatpush.msra.mxu0 %v58
    %267 = vmatpush.msra.mxu0 %v57
    %268 = vmatpush.msra.mxu0 %v56
    %269 = vmatpush.msra.mxu0 %v55
    %270 = vmatpush.msra.mxu0 %v54
    %271 = vmatpush.msra.mxu0 %v53
    %272 = vmatpush.msra.mxu0 %v52
    %273 = vmatpush.msra.mxu0 %v51
    %274 = vmatpush.msra.mxu0 %v50
    %275 = vmatpush.msra.mxu0 %v49
    %276 = vmatpush.msra.mxu0 %v48
    %277 = vmatpush.msra.mxu0 %v47
    %278 = vmatpush.msra.mxu0 %v46
    %279 = vmatpush.msra.mxu0 %v45
    %280 = vmatpush.msra.mxu0 %v44
    %281 = vmatmul.f32.gmra.mxu0 %v261
    %v282 = vpop.f32.mrf.mxu0
    %v283 = vadd.f32 %v107, %v282
    %284 = vmatmul.f32.gmra.mxu0 %v263
    %v285 = vpop.f32.mrf.mxu0
    %v286 = vadd.f32 %v107, %v285
    %287 = vmatmul.f32.gmra.mxu0 %v262
    %v288 = vpop.f32.mrf.mxu0
    %v289 = vadd.f32 %v107, %v288
    %290 = vmatmul.f32.gmra.mxu0 %v264
    %v291 = vpop.f32.mrf.mxu0
    %v292 = vadd.f32 %v107, %v291
    %293 = vdwg.mxu0
    %v294 = vmul.f32 %v283, %v283
    %v295 = vmul.f32 %v286, %v286
    %296 = vadd.xlane.f32.xlu0 %v294
    %v297 = vpop.xlane.xlu0 %296
    %298 = vadd.xlane.f32.xlu0 %v295
    %v299 = vpop.xlane.xlu0 %298
    %v300 = vadd.f32 %v297, 1e-08
    %v301 = vadd.f32 %v299, 1e-08
    %v302 = vrsqrt.pop %v300
    %v303 = vmul.f32 %v302, %v300
    %v304 = vmul.f32 %v303, %v302
    %v305 = vmul.f32 0.5, %v304
    %v306 = vsub.f32 1.5, %v305
    %v307 = vmul.f32 %v302, %v306
    %vm308 = vweird.f32 %v300
    %vm309 = vweird.f32 %v302
    %vm310 = vmor %vm308, %vm309
    %v311 = vsel %vm310, %v302, %v307
    %v312 = vrsqrt.pop %v301
    %v313 = vmul.f32 %v312, %v301
    %v314 = vmul.f32 %v313, %v312
    %v315 = vmul.f32 0.5, %v314
    %v316 = vsub.f32 1.5, %v315
    %v317 = vmul.f32 %v312, %v316
    %vm318 = vweird.f32 %v301
    %vm319 = vweird.f32 %v312
    %vm320 = vmor %vm318, %vm319
    %v321 = vsel %vm320, %v312, %v317
    %v322 = vmul.f32 %v283, %v311
    %v323 = vmul.f32 %v286, %v321
    %v324 = vmul.f32 %v289, %v289
    %v325 = vmul.f32 %v292, %v292
    %326 = vadd.xlane.f32.xlu0 %v324
    %v327 = vpop.xlane.xlu0 %326
    %328 = vadd.xlane.f32.xlu0 %v325
    %v329 = vpop.xlane.xlu0 %328
    %v330 = vadd.f32 %v327, 1e-08
    %v331 = vadd.f32 %v329, 1e-08
    %v332 = vrsqrt.pop %v330
    %v333 = vmul.f32 %v332, %v330
    %v334 = vmul.f32 %v333, %v332
    %v335 = vmul.f32 0.5, %v334
    %v336 = vsub.f32 1.5, %v335
    %v337 = vmul.f32 %v332, %v336
    %vm338 = vweird.f32 %v330
    %vm339 = vweird.f32 %v332
    %vm340 = vmor %vm338, %vm339
    %v341 = vsel %vm340, %v332, %v337
    %v342 = vrsqrt.pop %v331
    %v343 = vmul.f32 %v342, %v331
    %v344 = vmul.f32 %v343, %v342
    %v345 = vmul.f32 0.5, %v344
    %v346 = vsub.f32 1.5, %v345
    %v347 = vmul.f32 %v342, %v346
    %vm348 = vweird.f32 %v331
    %vm349 = vweird.f32 %v342
    %vm350 = vmor %vm348, %vm349
    %v351 = vsel %vm350, %v342, %v347
    %v352 = vmul.f32 %v289, %v341
    %v353 = vmul.f32 %v292, %v351
    %354 = vmatpush.xpose.msra.mxu0 0.0
    %355 = vmatpush.xpose.msra.mxu0 0.0
    %356 = vmatpush.xpose.msra.mxu0 0.0
    %357 = vmatpush.xpose.msra.mxu0 0.0
    %358 = vmatpush.xpose.msra.mxu0 0.0
    %359 = vmatpush.xpose.msra.mxu0 0.0
    %360 = vmatpush.xpose.msra.mxu0 0.0
    %361 = vmatpush.xpose.msra.mxu0 0.0
    %362 = vmatpush.xpose.msra.mxu0 0.0
    %363 = vmatpush.xpose.msra.mxu0 0.0
    %364 = vmatpush.xpose.msra.mxu0 0.0
    %365 = vmatpush.xpose.msra.mxu0 0.0
    %366 = vmatpush.xpose.msra.mxu0 0.0
    %367 = vmatpush.xpose.msra.mxu0 0.0
    %368 = vmatpush.xpose.msra.mxu0 0.0
    %369 = vmatpush.xpose.msra.mxu0 %v352
    %370 = vmatmul.f32.gmra.mxu0 %v322
    %v371 = vpop.f32.mrf.mxu0
    %v372 = vadd.f32 0.0, %v371
    %373 = vdwg.mxu0
    %374 = vmatpush.xpose.msra.mxu0 0.0
    %375 = vmatpush.xpose.msra.mxu0 0.0
    %376 = vmatpush.xpose.msra.mxu0 0.0
    %377 = vmatpush.xpose.msra.mxu0 0.0
    %378 = vmatpush.xpose.msra.mxu0 0.0
    %379 = vmatpush.xpose.msra.mxu0 0.0
    %380 = vmatpush.xpose.msra.mxu0 0.0
    %381 = vmatpush.xpose.msra.mxu0 0.0
    %382 = vmatpush.xpose.msra.mxu0 0.0
    %383 = vmatpush.xpose.msra.mxu0 0.0
    %384 = vmatpush.xpose.msra.mxu0 0.0
    %385 = vmatpush.xpose.msra.mxu0 0.0
    %386 = vmatpush.xpose.msra.mxu0 0.0
    %387 = vmatpush.xpose.msra.mxu0 0.0
    %388 = vmatpush.xpose.msra.mxu0 0.0
    %389 = vmatpush.xpose.msra.mxu0 %v353
    %390 = vmatmul.f32.gmra.mxu0 %v323
    %v391 = vpop.f32.mrf.mxu0
    %v392 = vadd.f32 0.0, %v391
    %393 = vdwg.mxu0
    %vm394 = vcmask 64512
    %v395 = vsel %vm394, %v372, -inf
    %396 = vmax.xlane.f32.xlu0 %v395
    %v397 = vpop.xlane.xlu0 %396
    %v398 = vsel %vm394, %v392, -inf
    %399 = vmax.xlane.f32.xlu0 %v398
    %v400 = vpop.xlane.xlu0 %399
    %v401 = vsub.f32 %v372, %v397
    %v402 = vsub.f32 %v392, %v400
    %v403 = vmul.f32 %v401, 1.442695
    %v404 = vpow.pop %v403
    %v405 = vmul.f32 %v402, 1.442695
    %v406 = vpow.pop %v405
    %v407 = vsel %vm394, %v404, 0.0
    %408 = vadd.xlane.f32.xlu0 %v407
    %v409 = vpop.xlane.xlu0 %408
    %v410 = vsel %vm394, %v406, 0.0
    %411 = vadd.xlane.f32.xlu0 %v410
    %v412 = vpop.xlane.xlu0 %411
    %v413 = vrcp.pop %v409
    %v414 = vrcp.pop %v412
    %v415 = vmul.f32 %v404, %v413
    %v416 = vmul.f32 %v406, %v414
    %v418 = vsel %vm394, %v415, 0
    %420 = vmatpush.msra.mxu0 0.0
    %421 = vmatpush.msra.mxu0 0.0
    %422 = vmatpush.msra.mxu0 0.0
    %423 = vmatpush.msra.mxu0 0.0
    %424 = vmatpush.msra.mxu0 0.0
    %425 = vmatpush.msra.mxu0 0.0
    %426 = vmatpush.msra.mxu0 0.0
    %427 = vmatpush.msra.mxu0 0.0
    %428 = vmatpush.msra.mxu0 0.0
    %429 = vmatpush.msra.mxu0 0.0
    %430 = vmatpush.msra.mxu0 0.0
    %431 = vmatpush.msra.mxu0 0.0
    %432 = vmatpush.msra.mxu0 0.0
    %433 = vmatpush.msra.mxu0 0.0
    %434 = vmatpush.msra.mxu0 0.0
    %435 = vmatpush.msra.mxu0 %v172
    %436 = vmatmul.f32.gmra.mxu0 %v418
    %v437 = vpop.f32.mrf.mxu0
    %v438 = vadd.f32 0.0, %v437
    %439 = vdwg.mxu0
    %v441 = vsel %vm394, %v416, 0
    %443 = vmatpush.msra.mxu0 0.0
    %444 = vmatpush.msra.mxu0 0.0
    %445 = vmatpush.msra.mxu0 0.0
    %446 = vmatpush.msra.mxu0 0.0
    %447 = vmatpush.msra.mxu0 0.0
    %448 = vmatpush.msra.mxu0 0.0
    %449 = vmatpush.msra.mxu0 0.0
    %450 = vmatpush.msra.mxu0 0.0
    %451 = vmatpush.msra.mxu0 0.0
    %452 = vmatpush.msra.mxu0 0.0
    %453 = vmatpush.msra.mxu0 0.0
    %454 = vmatpush.msra.mxu0 0.0
    %455 = vmatpush.msra.mxu0 0.0
    %456 = vmatpush.msra.mxu0 0.0
    %457 = vmatpush.msra.mxu0 0.0
    %458 = vmatpush.msra.mxu0 %v175
    %459 = vmatmul.f32.gmra.mxu0 %v441
    %v460 = vpop.f32.mrf.mxu0
    %v461 = vadd.f32 0.0, %v460
    %462 = vdwg.mxu0
    %v463 = vld [vmem:[%s9] sm:$0xff]
    %v464 = vld [vmem:[%s9 + $0x8] sm:$0xff]
    %v465 = vld [vmem:[%s9 + $0x10] sm:$0xff]
    %v466 = vld [vmem:[%s9 + $0x18] sm:$0xff]
    %v467 = vld [vmem:[%s9 + $0x20] sm:$0xff]
    %v468 = vld [vmem:[%s9 + $0x28] sm:$0xff]
    %v469 = vld [vmem:[%s9 + $0x30] sm:$0xff]
    %v470 = vld [vmem:[%s9 + $0x38] sm:$0xff]
    %v471 = vld [vmem:[%s9 + $0x40] sm:$0xff]
    %v472 = vld [vmem:[%s9 + $0x48] sm:$0xff]
    %v473 = vld [vmem:[%s9 + $0x50] sm:$0xff]
    %v474 = vld [vmem:[%s9 + $0x58] sm:$0xff]
    %v475 = vld [vmem:[%s9 + $0x60] sm:$0xff]
    %v476 = vld [vmem:[%s9 + $0x68] sm:$0xff]
    %v477 = vld [vmem:[%s9 + $0x70] sm:$0xff]
    %v478 = vld [vmem:[%s9 + $0x78] sm:$0xff]
    %v479 = vld [vmem:[%s10] sm:$0x1]
    %v481 = vperm.slane %v479, 0
    %483 = vmatpush.msra.mxu0 %v478
    %484 = vmatpush.msra.mxu0 %v477
    %485 = vmatpush.msra.mxu0 %v476
    %486 = vmatpush.msra.mxu0 %v475
    %487 = vmatpush.msra.mxu0 %v474
    %488 = vmatpush.msra.mxu0 %v473
    %489 = vmatpush.msra.mxu0 %v472
    %490 = vmatpush.msra.mxu0 %v471
    %491 = vmatpush.msra.mxu0 %v470
    %492 = vmatpush.msra.mxu0 %v469
    %493 = vmatpush.msra.mxu0 %v468
    %494 = vmatpush.msra.mxu0 %v467
    %495 = vmatpush.msra.mxu0 %v466
    %496 = vmatpush.msra.mxu0 %v465
    %497 = vmatpush.msra.mxu0 %v464
    %498 = vmatpush.msra.mxu0 %v463
    %499 = vmatmul.f32.gmra.mxu0 %v438
    %v500 = vpop.f32.mrf.mxu0
    %v501 = vadd.f32 %v481, %v500
    %502 = vmatmul.f32.gmra.mxu0 %v461
    %v503 = vpop.f32.mrf.mxu0
    %v504 = vadd.f32 %v481, %v503
    %505 = vdwg.mxu0
    %506 = vst [vmem:[#allocation4] sm:$0xff] %v501
    %507 = vst [vmem:[#allocation4 + $0x8] sm:$0xff] %v504
    // Predicated region
    $region46: #{quantum_llm_forward.1} parent=1 // pred_check
      _
    $region47: #{quantum_llm_forward.1} parent=1 // pred_check_branch
      %509 = sbr.rel (0) target = $region49
    $region48: #{quantum_llm_forward.1} parent=1 // pred_region
      %511 = vsyncadd [#allocation3], 0
      %s512 = sshll.u32 [#allocation2], 4
      %s513 = int_to_ptr.vmem [resolvable:$true] %s512
      %s514 = sshll.u32 %s11, 4
      %s515 = int_to_ptr.hbm [resolvable:$true] %s514
      %520 = dma.vmem_to_hbm [thread:$0]  %s513, 256, %s515, [#allocation3], 128, 128, 8
    $region49: #{quantum_llm_forward.1} parent=1 // pred_fallthru
      _
    // Predicated region
    $region50: #{quantum_llm_forward.1} parent=1 // pred_check
      _
    $region51: #{quantum_llm_forward.1} parent=1 // pred_check_branch
      %522 = sbr.rel (0) target = $region53
    $region52: #{quantum_llm_forward.1} parent=1 // pred_region
      %524 = vsyncadd [#allocation5], 0
      %s525 = sshll.u32 [#allocation4], 4
      %s526 = int_to_ptr.vmem [resolvable:$true] %s525
      %s527 = sshll.u32 %s12, 4
      %s528 = int_to_ptr.hbm [resolvable:$true] %s527
      %533 = dma.vmem_to_hbm [thread:$0]  %s526, 256, %s528, [#allocation5], 128, 128, 8
    $region53: #{quantum_llm_forward.1} parent=1 // pred_fallthru
      _
    // Predicated region
    $region54: #{quantum_llm_forward.1} parent=1 // pred_check
      _
    $region55: #{quantum_llm_forward.1} parent=1 // pred_check_branch
      %535 = sbr.rel (0) target = $region57
    $region56: #{quantum_llm_forward.1} parent=1 // pred_region
      %537 = dma.done [#allocation3], 256
    $region57: #{quantum_llm_forward.1} parent=1 // pred_fallthru
      _
    // Predicated region
    $region58: #{quantum_llm_forward.1} parent=1 // pred_check
      _
    $region59: #{quantum_llm_forward.1} parent=1 // pred_check_branch
      %539 = sbr.rel (0) target = $region61
    $region60: #{quantum_llm_forward.1} parent=1 // pred_region
      %541 = dma.done [#allocation5], 256
    $region61: #{quantum_llm_forward.1} parent=1 // pred_fallthru
      _
    %542 = vsyncpa [#allocation3], 1
    %543 = vsyncpa [#allocation5], 1

</llo_original>
